<compile_context>
chip_gen: v5e
topology: v5e:2x2
jax: 0.10.0
libtpu: 0.0.40
codegen_flags: <defaults>
</compile_context>

<pallas_src>
import jax
import jax.numpy as jnp
import numpy as np
from jax.experimental import pallas as pl
from jax.experimental.pallas import tpu as pltpu


_ROLL_SIGN = None  # +1 if pltpu.roll matches np.roll (result[i] = x[i - shift]), else -1.


def _roll_sign():
    """Detect pltpu.roll's rotation direction once with a tiny probe kernel."""
    global _ROLL_SIGN
    if _ROLL_SIGN is None:
        def probe(x_ref, o_ref):
            o_ref[...] = pltpu.roll(x_ref[...], 1, axis=1)

        x = jnp.tile(jnp.arange(128, dtype=jnp.float32)[None, :], (8, 1))
        out = pl.pallas_call(
            probe, out_shape=jax.ShapeDtypeStruct((8, 128), jnp.float32))(x)
        v = int(np.asarray(out)[0, 0])
        if v == 127:
            _ROLL_SIGN = 1     # np.roll convention
        elif v == 1:
            _ROLL_SIGN = -1    # opposite convention
        else:                  # unexpected; fall back to documented np.roll convention
            _ROLL_SIGN = 1
    return _ROLL_SIGN


def _make_kernel(C, D, H, W, roll_sign):
    HW = H * W

    def rollnp(x, s):
        # np.roll(x, s, axis=-1) semantics via pltpu.roll (XLU lane rotation).
        return pltpu.roll(x, (roll_sign * s) % HW, axis=1)

    def kernel(x_ref, w1_ref, b1_ref, w2_ref, b2_ref, w3_ref, b3_ref,
               out_ref, pad_ref):
        f32 = jnp.float32

        # ---- zero only the two D-halo rows; interior rows get fully overwritten every step ----
        zrow = jnp.zeros((1, HW), f32)
        for ci in range(C):
            pad_ref[ci, pl.ds(0, 1), :] = zrow
            pad_ref[ci, pl.ds(D + 1, 1), :] = zrow

        # ---- H/W boundary masks (the D boundary is handled by the zero halo rows) ----
        lane = jax.lax.broadcasted_iota(jnp.int32, (D, HW), 1)
        w_idx = lane % W
        h_idx = lane // W
        w_ok = {-1: w_idx >= 1, 0: None, 1: w_idx <= W - 2}
        h_ok = {-1: h_idx >= 1, 0: None, 1: h_idx <= H - 2}

        def write_interior(ci, slab):
            pad_ref[ci, pl.ds(1, D), :] = slab

        def conv3x3x3_relu(w_ref, b_ref):
            # Loop over input channel ci to bound live ranges (accumulators are the carry);
            # (dz, dh, dw, co) stay unrolled so slice offsets / roll amounts are static.
            def body(ci, accs):
                accs = list(accs)
                for dz in (-1, 0, 1):
                    # One aligned, lane-dense (D, HW) load per (ci, dz).
                    center = pad_ref[ci, pl.ds(1 + dz, D), :]
                    # W-shifted variants (dw = -1, 0, +1): wrapped lanes are exactly the
                    # masked w-boundary columns, so this equals zero padding.
                    cw = {0: center}
                    for dw in (-1, 1):
                        cw[dw] = jnp.where(w_ok[dw], rollnp(center, -dw), 0.0)
                    for dh in (-1, 0, 1):
                        for dw in (-1, 0, 1):
                            if dh == 0:
                                tap = cw[dw]
                            else:
                                # H shift by dh*W lanes; wrapped lanes are the masked h rows.
                                tap = jnp.where(h_ok[dh],
                                                rollnp(cw[dw], -dh * W), 0.0)
                            kidx = ((dz + 1) * 3 + (dh + 1)) * 3 + (dw + 1)
                            base = (kidx * C + ci) * C     # dynamic SMEM scalar index
                            for co in range(C):
                                accs[co] = accs[co] + w_ref[base + co] * tap
                return tuple(accs)

            accs = jax.lax.fori_loop(
                0, C, body, tuple(jnp.zeros((D, HW), f32) for _ in range(C)))
            return [jnp.maximum(accs[co] + b_ref[co], 0.0) for co in range(C)]

        # ---- conv1 (3x3x3, pad 1) + ReLU ----
        for ci in range(C):
            write_interior(ci, x_ref[0, ci].astype(f32))
        h1 = conv3x3x3_relu(w1_ref, b1_ref)

        # ---- conv2 (3x3x3, pad 1) + ReLU: reuse the scratch, halo rows still zero ----
        for ci in range(C):
            write_interior(ci, h1[ci])
        h2 = conv3x3x3_relu(w2_ref, b2_ref)

        # ---- conv3 (1x1x1) + bias + residual ----
        for co in range(C):
            y = x_ref[0, co].astype(f32) + b3_ref[co]
            for ci in range(C):
                y = y + w3_ref[ci * C + co] * h2[ci]
            out_ref[0, co] = y.astype(out_ref.dtype)

    return kernel


def resblock2(x_ncdhw, params):
    """Fused ResBlock2 forward.

    x_ncdhw: (N, C, D, H, W) float32 (PyTorch NCDHW layout).
    params:  (w1, b1, w2, b2, w3, b3) with w1, w2: (3,3,3,C_in,C_out), w3: (C_in,C_out), b*: (C,).
    """
    N, C, D, H, W = x_ncdhw.shape
    HW = H * W
    w1, b1, w2, b2, w3, b3 = params

    kernel = _make_kernel(C, D, H, W, _roll_sign())

    x2 = x_ncdhw.reshape(N, C, D, HW)
    w1f = w1.reshape(-1)   # index (((kd*3+kh)*3+kw)*C + ci)*C + co
    w2f = w2.reshape(-1)
    w3f = w3.reshape(-1)   # index ci*C + co

    smem_spec = pl.BlockSpec(memory_space=pltpu.MemorySpace.SMEM)
    x_spec = pl.BlockSpec((1, C, D, HW), lambda n: (n, 0, 0, 0))

    grid_spec = pltpu.PrefetchScalarGridSpec(
        num_scalar_prefetch=0,
        grid=(N,),
        in_specs=[x_spec, smem_spec, smem_spec, smem_spec, smem_spec, smem_spec, smem_spec],
        out_specs=x_spec,
        scratch_shapes=[pltpu.VMEM((C, D + 2, HW), jnp.float32)],
    )
    out = pl.pallas_call(
        kernel,
        out_shape=jax.ShapeDtypeStruct((N, C, D, HW), x_ncdhw.dtype),
        grid_spec=grid_spec,
        compiler_params=pltpu.CompilerParams(dimension_semantics=("parallel",)),
    )(x2, w1f, b1, w2f, b2, w3f, b3)
    return out.reshape(N, C, D, H, W)


def resblock2_reference(x_ncdhw, params):
    """Pure-JAX reference (lax.conv_general_dilated) in NCDHW, for correctness checking."""
    w1, b1, w2, b2, w3, b3 = params
    x = jnp.transpose(x_ncdhw, (0, 2, 3, 4, 1))   # -> NDHWC

    def conv3(x, w, b):
        y = jax.lax.conv_general_dilated(
            x, w, window_strides=(1, 1, 1), padding="SAME",
            dimension_numbers=("NDHWC", "DHWIO", "NDHWC"))
        return y + b.reshape(1, 1, 1, 1, -1)

    h = jax.nn.relu(conv3(x, w1, b1))
    h = jax.nn.relu(conv3(h, w2, b2))
    y = jnp.einsum("ndhwc,co->ndhwo", h, w3) + b3.reshape(1, 1, 1, 1, -1)
    y = y + x
    return jnp.transpose(y, (0, 4, 1, 2, 3))       # -> NCDHW


def init_params(key, chan):
    k1, k2, k3, k4, k5, k6 = jax.random.split(key, 6)
    w1 = 0.1 * jax.random.normal(k1, (3, 3, 3, chan, chan), jnp.float32)
    b1 = 0.05 * jax.random.normal(k2, (chan,), jnp.float32)
    w2 = 0.1 * jax.random.normal(k3, (3, 3, 3, chan, chan), jnp.float32)
    b2 = 0.05 * jax.random.normal(k4, (chan,), jnp.float32)
    w3 = 0.1 * jax.random.normal(k5, (chan, chan), jnp.float32)
    b3 = 0.05 * jax.random.normal(k6, (chan,), jnp.float32)
    return (w1, b1, w2, b2, w3, b3)


if __name__ == "__main__":
    key = jax.random.PRNGKey(0)
    k_x, k_p = jax.random.split(key)

    N, C, D, H, W = 2, 4, 16, 16, 16            # PyTorch-style NCDHW sizes
    x_ncdhw = jax.random.normal(k_x, (N, C, D, H, W), jnp.float32)
    params = init_params(k_p, C)

    out = jax.block_until_ready(resblock2(x_ncdhw, params))
    ref = jax.block_until_ready(resblock2_reference(x_ncdhw, params))

    np.testing.assert_allclose(np.asarray(out), np.asarray(ref), rtol=1e-4, atol=1e-3)
    print("KERNEL_OK")
</pallas_src>

<mosaic_0001>
module attributes {stable_mosaic.version = 11 : i64} {
  func.func @probe(%arg0: memref<8x128xf32, #tpu.memory_space<vmem>>, %arg1: memref<8x128xf32, #tpu.memory_space<vmem>>) attributes {dimension_semantics = [], scalar_prefetch = 0 : i64, scratch_operands = 0 : i64, tpu.core_type = #tpu.core_type<tc>} {
    %c0 = arith.constant 0 : index
    %c0_0 = arith.constant 0 : index
    %0 = vector.load %arg0[%c0, %c0_0] : memref<8x128xf32, #tpu.memory_space<vmem>>, vector<8x128xf32>
    %c1_i32 = arith.constant 1 : i32
    %1 = tpu.dynamic_rotate %0 by %c1_i32 dim 1 : vector<8x128xf32>, i32 -> vector<8x128xf32>
    %c0_1 = arith.constant 0 : index
    %c0_2 = arith.constant 0 : index
    %2 = vector.load %arg1[%c0_1, %c0_2] : memref<8x128xf32, #tpu.memory_space<vmem>>, vector<8x128xf32>
    tpu.vector_store %arg1[%c0_1, %c0_2], %1 {strides = array<i32>} : memref<8x128xf32, #tpu.memory_space<vmem>>, vector<8x128xf32>,
    return
  }
}

</mosaic_0001>

<llo_original>
// kernel: tpu_custom_call.1
$region0: #{tpu_custom_call.1}
  #allocation0 [shape = 'u32[]', space=smem, size = 0x4, offset = 0x4, fixed_abs, tag = 'smem constant byte address 0x4 - core index']
  #allocation1 [shape = 'u32[72,128]{1,0:T(1,128)}', space=vmem, size = 0x9000, scoped, tag = 'internal scratch']
  %s0 = inlined_call_operand.hbm [shape: f32[8,128], index: 0, kind: input, shape index: {}]
  %s1 = inlined_call_operand.hbm [shape: f32[8,128], index: 1, kind: output, shape index: {}]
  %s2 = sld [smem:[#allocation0]]
  $region18: #{tpu_custom_call.1} parent=0
    _
  %s4 = ssub.s32 1, %s2
  %s5 = scalar_select 0, %s4, %s2
  $region1: #{tpu_custom_call.1} parent=0
    #allocation2 [shape = 'u8[4096]{0}', space=vmem, size = 0x1000, scoped, tag = 'input window, operand 0, single buffered']
    #allocation3 [shape = 's32[1]{0}', space=sflag, size = 0x4, scoped, tag = 'scoped memory for tpu_custom_call.1']
    #allocation4 [shape = 's32[1]{0}', space=sflag, size = 0x4, scoped, tag = 'scoped memory for tpu_custom_call.1']
    #allocation5 [shape = 'u8[4096]{0}', space=vmem, size = 0x1000, scoped, tag = 'output window, operand 0, single buffered']
    %6 = vsyncpa [#allocation3], 0
    %7 = vsyncpa [#allocation4], 0
    // Predicated region
    $region2: #{tpu_custom_call.1} parent=1 // pred_check
      _
    $region3: #{tpu_custom_call.1} parent=1 // pred_check_branch
      %9 = sbr.rel (0) target = $region5
    $region4: #{tpu_custom_call.1} parent=1 // pred_region
      %11 = vsyncadd [#allocation3], 0
      %s13 = sshll.u32 %s0, 4
      %s14 = int_to_ptr.hbm [resolvable:$true] %s13
      %s15 = sshll.u32 [#allocation2], 4
      %s16 = int_to_ptr.vmem [resolvable:$true] %s15
      %18 = dma.hbm_to_vmem [thread:$0]  %s14, 128, %s16, [#allocation3]
    $region5: #{tpu_custom_call.1} parent=1 // pred_fallthru
      _
    // Predicated region
    $region6: #{tpu_custom_call.1} parent=1 // pred_check
      _
    $region7: #{tpu_custom_call.1} parent=1 // pred_check_branch
      %20 = sbr.rel (0) target = $region9
    $region8: #{tpu_custom_call.1} parent=1 // pred_region
      %22 = dma.done [#allocation3], 128
    $region9: #{tpu_custom_call.1} parent=1 // pred_fallthru
      _
    %v23 = vld [vmem:[#allocation2] sm:$0xff]
    %24 = vrot.lane.b32.xlu0 %v23, 1
    %v25 = vpop.permute.xlu0 %24
    %26 = vst [vmem:[#allocation5] sm:$0xff] %v25
    // Predicated region
    $region10: #{tpu_custom_call.1} parent=1 // pred_check
      _
    $region11: #{tpu_custom_call.1} parent=1 // pred_check_branch
      %28 = sbr.rel (0) target = $region13
    $region12: #{tpu_custom_call.1} parent=1 // pred_region
      %30 = vsyncadd [#allocation4], 0
      %s32 = sshll.u32 [#allocation5], 4
      %s33 = int_to_ptr.vmem [resolvable:$true] %s32
      %s34 = sshll.u32 %s1, 4
      %s35 = int_to_ptr.hbm [resolvable:$true] %s34
      %37 = dma.vmem_to_hbm [thread:$0]  %s33, 128, %s35, [#allocation4]
    $region13: #{tpu_custom_call.1} parent=1 // pred_fallthru
      _
    // Predicated region
    $region14: #{tpu_custom_call.1} parent=1 // pred_check
      _
    $region15: #{tpu_custom_call.1} parent=1 // pred_check_branch
      %39 = sbr.rel (0) target = $region17
    $region16: #{tpu_custom_call.1} parent=1 // pred_region
      %41 = dma.done [#allocation4], 128
    $region17: #{tpu_custom_call.1} parent=1 // pred_fallthru
      _
    %42 = vsyncpa [#allocation3], 1
    %43 = vsyncpa [#allocation4], 1

</llo_original>
